<compile_context>
chip_gen: v7x
topology: tpu7x:2x2x1
jax: 0.10.0
libtpu: 0.0.40
codegen_flags: <defaults>
</compile_context>

<pallas_src>
import jax
import jax.numpy as jnp
from jax.experimental import pallas as pl
from jax.experimental.pallas import tpu as pltpu


def _round_up(x, m):
    return (x + m - 1) // m * m


def _reg_branch_kernel(x_ref, w1_ref, b1_ref, w2_ref, b2_ref, o_ref):
    """All num_fcs (Linear -> ReLU -> Linear) blocks for one token tile.

    x_ref  : [TILE_N, Cin_p]                 (param dtype: f32 or bf16)
    w1_ref : [num_fcs, Cin_p,  Cmid_p]       (param dtype)
    b1_ref : [num_fcs, 1,      Cmid_p]       (f32)
    w2_ref : [num_fcs, Cmid_p, Cout_p]       (param dtype)
    b2_ref : [num_fcs, 1,      Cout_p]       (f32)
    o_ref  : [TILE_N, Cout_p]                (param dtype)
    Chaining requires Cout_p == Cin_p when num_fcs > 1 (enforced in wrapper).
    """
    num_fcs = w1_ref.shape[0]
    compute_dtype = w1_ref.dtype
    act = x_ref[...]
    # num_fcs is a small static constant -> unrolled Python loop; the
    # intermediate activation stays in vregs/VMEM across blocks.
    for fc in range(num_fcs):
        h = jnp.dot(act.astype(compute_dtype), w1_ref[fc],
                    preferred_element_type=jnp.float32) + b1_ref[fc]
        h = jnp.maximum(h, 0.0)                             # ReLU in f32 (VPU)
        act = jnp.dot(h.astype(compute_dtype), w2_ref[fc],
                      preferred_element_type=jnp.float32) + b2_ref[fc]
    o_ref[...] = act.astype(o_ref.dtype)


def _reg_branch_forward(x2d_padded, w1, b1, w2, b2, *, tile_n):
    n_pad, cin_p = x2d_padded.shape
    cout_p = w2.shape[-1]
    grid = (n_pad // tile_n,)
    return pl.pallas_call(
        _reg_branch_kernel,
        out_shape=jax.ShapeDtypeStruct((n_pad, cout_p), x2d_padded.dtype),
        grid=grid,
        in_specs=[
            # Token tile walks the grid; lane dim is a multiple of 128.
            pl.BlockSpec((tile_n, cin_p), lambda i: (i, 0)),
            # Weights/biases: same block every step -> no re-DMA, VMEM-resident.
            pl.BlockSpec(w1.shape, lambda i: (0, 0, 0)),
            pl.BlockSpec(b1.shape, lambda i: (0, 0, 0)),
            pl.BlockSpec(w2.shape, lambda i: (0, 0, 0)),
            pl.BlockSpec(b2.shape, lambda i: (0, 0, 0)),
        ],
        out_specs=pl.BlockSpec((tile_n, cout_p), lambda i: (i, 0)),
        compiler_params=pltpu.CompilerParams(
            # Independent token tiles -> shard across both TCs on v7x,
            # neutral on single-TC v5e/v6e.
            dimension_semantics=("parallel",),
            # Working set is tiny (<4 MiB at TILE_N=256, 128-wide features);
            # 32 MiB is safely within v7x's 64 MiB physical VMEM and above
            # v5e's 16 MiB default scoped limit.
            vmem_limit_bytes=32 * 1024 * 1024,
        ),
    )(x2d_padded, w1, b1, w2, b2)


class RegBranchPallas:
    """JAX/Pallas port of the PyTorch RegBranch module."""

    # Token tile: multiple of 8 sublanes. 256 rows x 128 lanes keeps the
    # double-buffered working set far under v7x's 64 MiB VMEM while still
    # giving good DMA/compute overlap for large inputs.
    MAX_TILE_N = 256

    def __init__(self, num_fcs, in_channels, mid_channels, out_channels, key,
                 param_dtype=jnp.float32):
        if num_fcs > 1:
            # Chained blocks require out_channels == in_channels (same
            # constraint the PyTorch nn.Sequential implicitly has).
            assert out_channels == in_channels
        self.in_channels = in_channels
        self.out_channels = out_channels
        self.param_dtype = param_dtype

        # Lane-pad feature dims to multiples of 128 (lane-dense matmuls/stores).
        self.cin_p = _round_up(in_channels, 128)
        self.cmid_p = _round_up(mid_channels, 128)
        self.cout_p = _round_up(out_channels, 128)

        self.params = []   # raw (unpadded) f32 params, used by the reference
        w1s, b1s, w2s, b2s = [], [], [], []
        for fc in range(num_fcs):
            key, k1, k2 = jax.random.split(key, 3)
            # Linear(in_channels, mid_channels): default-ish uniform init.
            lim1 = 1.0 / (in_channels ** 0.5)
            w1 = jax.random.uniform(k1, (in_channels, mid_channels),
                                    jnp.float32, -lim1, lim1)
            b1 = jnp.zeros((mid_channels,), jnp.float32)
            if fc == num_fcs - 1:
                # _init_weights(): xavier_uniform on last Linear weight, bias 0.
                bound = (6.0 / (mid_channels + out_channels)) ** 0.5
                w2 = jax.random.uniform(k2, (mid_channels, out_channels),
                                        jnp.float32, -bound, bound)
            else:
                lim2 = 1.0 / (mid_channels ** 0.5)
                w2 = jax.random.uniform(k2, (mid_channels, out_channels),
                                        jnp.float32, -lim2, lim2)
            b2 = jnp.zeros((out_channels,), jnp.float32)
            self.params.append((w1, b1, w2, b2))

            # Zero-pad once at init; padded lanes stay exactly zero through
            # the whole chain, so results are unchanged.
            w1s.append(jnp.pad(w1, ((0, self.cin_p - in_channels),
                                    (0, self.cmid_p - mid_channels))))
            b1s.append(jnp.pad(b1, (0, self.cmid_p - mid_channels)).reshape(1, -1))
            w2s.append(jnp.pad(w2, ((0, self.cmid_p - mid_channels),
                                    (0, self.cout_p - out_channels))))
            b2s.append(jnp.pad(b2, (0, self.cout_p - out_channels)).reshape(1, -1))

        # Stacked, padded kernel params (weights in param_dtype, biases f32).
        self._w1 = jnp.stack(w1s).astype(param_dtype)   # [F, cin_p,  cmid_p]
        self._b1 = jnp.stack(b1s)                        # [F, 1,      cmid_p]
        self._w2 = jnp.stack(w2s).astype(param_dtype)   # [F, cmid_p, cout_p]
        self._b2 = jnp.stack(b2s)                        # [F, 1,      cout_p]

    def __call__(self, x):
        # x: [..., in_channels]; Linear acts on the last dim.
        lead = x.shape[:-1]
        x2d = x.reshape(-1, x.shape[-1])
        n = x2d.shape[0]
        tile_n = min(self.MAX_TILE_N, _round_up(max(n, 1), 8))
        n_pad = _round_up(n, tile_n)
        x2d = jnp.pad(x2d, ((0, n_pad - n), (0, self.cin_p - self.in_channels)))
        x2d = x2d.astype(self.param_dtype)
        out = _reg_branch_forward(x2d, self._w1, self._b1, self._w2, self._b2,
                                  tile_n=tile_n)
        out = out[:n, :self.out_channels].astype(x.dtype)
        return out.reshape(*lead, self.out_channels)


def _reference(x, params, compute_dtype=jnp.float32):
    """Pure-JAX reference mirroring the kernel's mixed-precision math."""
    lead = x.shape[:-1]
    h = x.reshape(-1, x.shape[-1])
    for (w1, b1, w2, b2) in params:
        a = jnp.dot(h.astype(compute_dtype), w1.astype(compute_dtype),
                    preferred_element_type=jnp.float32) + b1
        a = jnp.maximum(a, 0.0)
        h = jnp.dot(a.astype(compute_dtype), w2.astype(compute_dtype),
                    preferred_element_type=jnp.float32) + b2
    return h.reshape(*lead, h.shape[-1])


if __name__ == "__main__":
    key = jax.random.PRNGKey(0)
    key, kx, kp = jax.random.split(key, 3)

    # Small shapes: batch=2, seq=8, hidden(in)=32, mid=64, out=32.
    num_fcs, in_ch, mid_ch, out_ch = 2, 32, 64, 32
    x = jax.random.normal(kx, (2, 8, in_ch), jnp.float32)

    # f32 path: same semantics as the PyTorch module (up to MXU accum. order).
    model_f32 = RegBranchPallas(num_fcs, in_ch, mid_ch, out_ch, kp,
                                param_dtype=jnp.float32)
    y = jax.block_until_ready(model_f32(x))
    y_ref = _reference(x, model_f32.params, jnp.float32)
    assert y.shape == (2, 8, out_ch)
    assert jnp.allclose(y, y_ref, atol=1e-5, rtol=1e-5)

    # bf16 path (recommended on v6e/v7x): bf16 matmuls, f32 accumulation.
    # Compared against a reference doing the same mixed-precision math.
    model_bf16 = RegBranchPallas(num_fcs, in_ch, mid_ch, out_ch, kp,
                                 param_dtype=jnp.bfloat16)
    y16 = jax.block_until_ready(model_bf16(x))
    y16_ref = _reference(x, model_bf16.params, jnp.bfloat16)
    assert y16.shape == (2, 8, out_ch)
    assert jnp.allclose(y16, y16_ref, atol=1e-2, rtol=1e-2)

    print("KERNEL_OK")
</pallas_src>

<mosaic_0001>
module attributes {stable_mosaic.version = 11 : i64} {
  func.func @_reg_branch_kernel(%arg0: i32, %arg1: memref<16x128xf32, #tpu.memory_space<vmem>>, %arg2: memref<2x128x128xf32, #tpu.memory_space<vmem>>, %arg3: memref<2x1x128xf32, #tpu.memory_space<vmem>>, %arg4: memref<2x128x128xf32, #tpu.memory_space<vmem>>, %arg5: memref<2x1x128xf32, #tpu.memory_space<vmem>>, %arg6: memref<16x128xf32, #tpu.memory_space<vmem>>) attributes {dimension_semantics = [#tpu.dimension_semantics<parallel>], iteration_bounds = array<i64: 1>, scalar_prefetch = 0 : i64, scratch_operands = 0 : i64, tpu.core_type = #tpu.core_type<tc>, window_params = [{transform_indices = @transform_0, window_bounds = array<i64: 16, 128>}, {pipeline_mode = #tpu.pipeline_mode<synchronous>, transform_indices = @transform_1, window_bounds = array<i64: 2, 128, 128>}, {pipeline_mode = #tpu.pipeline_mode<synchronous>, transform_indices = @transform_2, window_bounds = array<i64: 2, 1, 128>}, {pipeline_mode = #tpu.pipeline_mode<synchronous>, transform_indices = @transform_3, window_bounds = array<i64: 2, 128, 128>}, {pipeline_mode = #tpu.pipeline_mode<synchronous>, transform_indices = @transform_4, window_bounds = array<i64: 2, 1, 128>}, {transform_indices = @transform_5, window_bounds = array<i64: 16, 128>}]} {
    %c0 = arith.constant 0 : index
    %c0_0 = arith.constant 0 : index
    %0 = vector.load %arg1[%c0, %c0_0] : memref<16x128xf32, #tpu.memory_space<vmem>>, vector<16x128xf32>
    %c0_1 = arith.constant 0 : index
    %c0_2 = arith.constant 0 : index
    %c0_3 = arith.constant 0 : index
    %1 = vector.load %arg2[%c0_1, %c0_2, %c0_3] : memref<2x128x128xf32, #tpu.memory_space<vmem>>, vector<1x128x128xf32>
    %2 = vector.shape_cast %1 : vector<1x128x128xf32> to vector<128x128xf32>
    %cst = arith.constant dense<0.000000e+00> : vector<16x128xf32>
    %3 = tpu.matmul %0, %2, %cst {dimension_numbers = #tpu.dot_dimension_numbers<[1], [0], [0], [1], [0, 0, 1, 1], [], []>} : vector<16x128xf32>, vector<128x128xf32>, vector<16x128xf32> -> vector<16x128xf32>
    %c0_4 = arith.constant 0 : index
    %c0_5 = arith.constant 0 : index
    %c0_6 = arith.constant 0 : index
    %4 = vector.load %arg3[%c0_4, %c0_5, %c0_6] : memref<2x1x128xf32, #tpu.memory_space<vmem>>, vector<1x1x128xf32>
    %5 = vector.shape_cast %4 : vector<1x1x128xf32> to vector<1x128xf32>
    %6 = vector.broadcast %5 : vector<1x128xf32> to vector<16x128xf32>
    %7 = arith.addf %3, %6 : vector<16x128xf32>
    %cst_7 = arith.constant 0.000000e+00 : f32
    %8 = vector.broadcast %cst_7 : f32 to vector<16x128xf32>
    %9 = arith.maximumf %7, %8 : vector<16x128xf32>
    %c0_8 = arith.constant 0 : index
    %c0_9 = arith.constant 0 : index
    %c0_10 = arith.constant 0 : index
    %10 = vector.load %arg4[%c0_8, %c0_9, %c0_10] : memref<2x128x128xf32, #tpu.memory_space<vmem>>, vector<1x128x128xf32>
    %11 = vector.shape_cast %10 : vector<1x128x128xf32> to vector<128x128xf32>
    %cst_11 = arith.constant dense<0.000000e+00> : vector<16x128xf32>
    %12 = tpu.matmul %9, %11, %cst_11 {dimension_numbers = #tpu.dot_dimension_numbers<[1], [0], [0], [1], [0, 0, 1, 1], [], []>} : vector<16x128xf32>, vector<128x128xf32>, vector<16x128xf32> -> vector<16x128xf32>
    %c0_12 = arith.constant 0 : index
    %c0_13 = arith.constant 0 : index
    %c0_14 = arith.constant 0 : index
    %13 = vector.load %arg5[%c0_12, %c0_13, %c0_14] : memref<2x1x128xf32, #tpu.memory_space<vmem>>, vector<1x1x128xf32>
    %14 = vector.shape_cast %13 : vector<1x1x128xf32> to vector<1x128xf32>
    %15 = vector.broadcast %14 : vector<1x128xf32> to vector<16x128xf32>
    %16 = arith.addf %12, %15 : vector<16x128xf32>
    %c1 = arith.constant 1 : index
    %c0_15 = arith.constant 0 : index
    %c0_16 = arith.constant 0 : index
    %17 = vector.load %arg2[%c1, %c0_15, %c0_16] : memref<2x128x128xf32, #tpu.memory_space<vmem>>, vector<1x128x128xf32>
    %18 = vector.shape_cast %17 : vector<1x128x128xf32> to vector<128x128xf32>
    %cst_17 = arith.constant dense<0.000000e+00> : vector<16x128xf32>
    %19 = tpu.matmul %16, %18, %cst_17 {dimension_numbers = #tpu.dot_dimension_numbers<[1], [0], [0], [1], [0, 0, 1, 1], [], []>} : vector<16x128xf32>, vector<128x128xf32>, vector<16x128xf32> -> vector<16x128xf32>
    %c1_18 = arith.constant 1 : index
    %c0_19 = arith.constant 0 : index
    %c0_20 = arith.constant 0 : index
    %20 = vector.load %arg3[%c1_18, %c0_19, %c0_20] : memref<2x1x128xf32, #tpu.memory_space<vmem>>, vector<1x1x128xf32>
    %21 = vector.shape_cast %20 : vector<1x1x128xf32> to vector<1x128xf32>
    %22 = vector.broadcast %21 : vector<1x128xf32> to vector<16x128xf32>
    %23 = arith.addf %19, %22 : vector<16x128xf32>
    %cst_21 = arith.constant 0.000000e+00 : f32
    %24 = vector.broadcast %cst_21 : f32 to vector<16x128xf32>
    %25 = arith.maximumf %23, %24 : vector<16x128xf32>
    %c1_22 = arith.constant 1 : index
    %c0_23 = arith.constant 0 : index
    %c0_24 = arith.constant 0 : index
    %26 = vector.load %arg4[%c1_22, %c0_23, %c0_24] : memref<2x128x128xf32, #tpu.memory_space<vmem>>, vector<1x128x128xf32>
    %27 = vector.shape_cast %26 : vector<1x128x128xf32> to vector<128x128xf32>
    %cst_25 = arith.constant dense<0.000000e+00> : vector<16x128xf32>
    %28 = tpu.matmul %25, %27, %cst_25 {dimension_numbers = #tpu.dot_dimension_numbers<[1], [0], [0], [1], [0, 0, 1, 1], [], []>} : vector<16x128xf32>, vector<128x128xf32>, vector<16x128xf32> -> vector<16x128xf32>
    %c1_26 = arith.constant 1 : index
    %c0_27 = arith.constant 0 : index
    %c0_28 = arith.constant 0 : index
    %29 = vector.load %arg5[%c1_26, %c0_27, %c0_28] : memref<2x1x128xf32, #tpu.memory_space<vmem>>, vector<1x1x128xf32>
    %30 = vector.shape_cast %29 : vector<1x1x128xf32> to vector<1x128xf32>
    %31 = vector.broadcast %30 : vector<1x128xf32> to vector<16x128xf32>
    %32 = arith.addf %28, %31 : vector<16x128xf32>
    %c0_29 = arith.constant 0 : index
    %c0_30 = arith.constant 0 : index
    %33 = vector.load %arg6[%c0_29, %c0_30] : memref<16x128xf32, #tpu.memory_space<vmem>>, vector<16x128xf32>
    tpu.vector_store %arg6[%c0_29, %c0_30], %32 {strides = array<i32>} : memref<16x128xf32, #tpu.memory_space<vmem>>, vector<16x128xf32>,
    return
  }
  func.func @transform_0(%arg0: i32) -> (i32, i32) {
    %c0_i32 = arith.constant 0 : i32
    %c0_i32_0 = arith.constant 0 : i32
    return %arg0, %c0_i32 : i32, i32
  }
  func.func @transform_1(%arg0: i32) -> (i32, i32, i32) {
    %c0_i32 = arith.constant 0 : i32
    %c0_i32_0 = arith.constant 0 : i32
    %c0_i32_1 = arith.constant 0 : i32
    %c0_i32_2 = arith.constant 0 : i32
    return %c0_i32, %c0_i32_0, %c0_i32_1 : i32, i32, i32
  }
  func.func @transform_2(%arg0: i32) -> (i32, i32, i32) {
    %c0_i32 = arith.constant 0 : i32
    %c0_i32_0 = arith.constant 0 : i32
    %c0_i32_1 = arith.constant 0 : i32
    %c0_i32_2 = arith.constant 0 : i32
    return %c0_i32, %c0_i32_0, %c0_i32_1 : i32, i32, i32
  }
  func.func @transform_3(%arg0: i32) -> (i32, i32, i32) {
    %c0_i32 = arith.constant 0 : i32
    %c0_i32_0 = arith.constant 0 : i32
    %c0_i32_1 = arith.constant 0 : i32
    %c0_i32_2 = arith.constant 0 : i32
    return %c0_i32, %c0_i32_0, %c0_i32_1 : i32, i32, i32
  }
  func.func @transform_4(%arg0: i32) -> (i32, i32, i32) {
    %c0_i32 = arith.constant 0 : i32
    %c0_i32_0 = arith.constant 0 : i32
    %c0_i32_1 = arith.constant 0 : i32
    %c0_i32_2 = arith.constant 0 : i32
    return %c0_i32, %c0_i32_0, %c0_i32_1 : i32, i32, i32
  }
  func.func @transform_5(%arg0: i32) -> (i32, i32) {
    %c0_i32 = arith.constant 0 : i32
    %c0_i32_0 = arith.constant 0 : i32
    return %arg0, %c0_i32 : i32, i32
  }
}

</mosaic_0001>

<llo_original>
// kernel: tpu_custom_call.1
$region0: #{tpu_custom_call.1}
  #allocation0 [shape = 'u32[]', space=smem, size = 0x4, offset = 0x4, fixed_abs, tag = 'smem constant byte address 0x4 - core index']
  #allocation1 [shape = 'u32[144,128]{1,0:T(1,128)}', space=vmem, size = 0x12000, scoped, tag = 'internal scratch']
  %s0 = inlined_call_operand.hbm [shape: f32[16,128], index: 0, kind: input, shape index: {}]
  %s1 = inlined_call_operand.hbm [shape: f32[2,128,128], index: 1, kind: input, shape index: {}]
  %s2 = inlined_call_operand.vmem [shape: f32[2,1,128], index: 2, kind: input, shape index: {}]
  %s3 = inlined_call_operand.hbm [shape: f32[2,128,128], index: 3, kind: input, shape index: {}]
  %s4 = inlined_call_operand.vmem [shape: f32[2,1,128], index: 4, kind: input, shape index: {}]
  %s5 = inlined_call_operand.hbm [shape: f32[16,128], index: 5, kind: output, shape index: {}]
  %s6 = sld [smem:[#allocation0]]
  $region42: #{tpu_custom_call.1} parent=0
    _
  %s8 = ssub.s32 1, %s6
  %s9 = scalar_select 0, %s8, %s6
  $region1: #{tpu_custom_call.1} parent=0
    #allocation2 [shape = 'u8[8192]{0}', space=vmem, size = 0x2000, scoped, tag = 'input window, operand 0, single buffered']
    #allocation3 [shape = 's32[1]{0}', space=sflag, size = 0x4, scoped, tag = 'scoped memory for tpu_custom_call.1']
    #allocation4 [shape = 's32[1]{0}', space=sflag, size = 0x4, scoped, tag = 'scoped memory for tpu_custom_call.1']
    #allocation5 [shape = 'u8[131072]{0}', space=vmem, size = 0x20000, scoped, tag = 'input window, operand 1, single buffered']
    #allocation6 [shape = 's32[1]{0}', space=sflag, size = 0x4, scoped, tag = 'scoped memory for tpu_custom_call.1']
    #allocation7 [shape = 'u8[131072]{0}', space=vmem, size = 0x20000, scoped, tag = 'input window, operand 3, single buffered']
    #allocation8 [shape = 'u8[8192]{0}', space=vmem, size = 0x2000, scoped, tag = 'output window, operand 0, single buffered']
    %10 = vsyncpa [#allocation3], 0
    %11 = vsyncpa [#allocation6], 0
    %12 = vsyncpa [#allocation4], 0
    // Predicated region
    $region2: #{tpu_custom_call.1} parent=1 // pred_check
      _
    $region3: #{tpu_custom_call.1} parent=1 // pred_check_branch
      %14 = sbr.rel (0) target = $region5
    $region4: #{tpu_custom_call.1} parent=1 // pred_region
      %s16 = ssub.s32 256, 256
      %17 = vsyncadd [#allocation3], %s16
      %s18 = sshll.u32 [#allocation2], 4
      %s19 = int_to_ptr.vmem [resolvable:$true] %s18
      %24 = dma.hbm_to_vmem [thread:$0]  %s0, 256, %s19, [#allocation3], 128, 128, 8
    $region5: #{tpu_custom_call.1} parent=1 // pred_fallthru
      _
    // Predicated region
    $region6: #{tpu_custom_call.1} parent=1 // pred_check
      _
    $region7: #{tpu_custom_call.1} parent=1 // pred_check_branch
      %26 = sbr.rel (0) target = $region9
    $region8: #{tpu_custom_call.1} parent=1 // pred_region
      %s28 = ssub.s32 4096, 4096
      %29 = vsyncadd [#allocation6], %s28
      %s30 = sshll.u32 [#allocation5], 4
      %s31 = int_to_ptr.vmem [resolvable:$true] %s30
      %36 = dma.hbm_to_vmem [thread:$0]  %s1, 4096, %s31, [#allocation6], 128, 128, 8
    $region9: #{tpu_custom_call.1} parent=1 // pred_fallthru
      _
    // Predicated region
    $region10: #{tpu_custom_call.1} parent=1 // pred_check
      _
    $region11: #{tpu_custom_call.1} parent=1 // pred_check_branch
      %38 = sbr.rel (0) target = $region13
    $region12: #{tpu_custom_call.1} parent=1 // pred_region
      _
    $region13: #{tpu_custom_call.1} parent=1 // pred_fallthru
      _
    // Predicated region
    $region14: #{tpu_custom_call.1} parent=1 // pred_check
      _
    $region15: #{tpu_custom_call.1} parent=1 // pred_check_branch
      %40 = sbr.rel (0) target = $region17
    $region16: #{tpu_custom_call.1} parent=1 // pred_region
      %s42 = ssub.s32 4096, 4096
      %43 = vsyncadd [#allocation6], %s42
      %s44 = sshll.u32 [#allocation7], 4
      %s45 = int_to_ptr.vmem [resolvable:$true] %s44
      %50 = dma.hbm_to_vmem [thread:$0]  %s3, 4096, %s45, [#allocation6], 128, 128, 8
    $region17: #{tpu_custom_call.1} parent=1 // pred_fallthru
      _
    // Predicated region
    $region18: #{tpu_custom_call.1} parent=1 // pred_check
      _
    $region19: #{tpu_custom_call.1} parent=1 // pred_check_branch
      %52 = sbr.rel (0) target = $region21
    $region20: #{tpu_custom_call.1} parent=1 // pred_region
      _
    $region21: #{tpu_custom_call.1} parent=1 // pred_fallthru
      _
    // Predicated region
    $region22: #{tpu_custom_call.1} parent=1 // pred_check
      _
    $region23: #{tpu_custom_call.1} parent=1 // pred_check_branch
      %54 = sbr.rel (0) target = $region25
    $region24: #{tpu_custom_call.1} parent=1 // pred_region
      %55 = dma.done [#allocation3], 256
    $region25: #{tpu_custom_call.1} parent=1 // pred_fallthru
      _
    // Predicated region
    $region26: #{tpu_custom_call.1} parent=1 // pred_check
      _
    $region27: #{tpu_custom_call.1} parent=1 // pred_check_branch
      %57 = sbr.rel (0) target = $region29
    $region28: #{tpu_custom_call.1} parent=1 // pred_region
      %58 = dma.done [#allocation6], 4096
    $region29: #{tpu_custom_call.1} parent=1 // pred_fallthru
      _
    // Predicated region
    $region30: #{tpu_custom_call.1} parent=1 // pred_check
      _
    $region31: #{tpu_custom_call.1} parent=1 // pred_check_branch
      %60 = sbr.rel (0) target = $region33
    $region32: #{tpu_custom_call.1} parent=1 // pred_region
      %61 = dma.done [#allocation6], 4096
    $region33: #{tpu_custom_call.1} parent=1 // pred_fallthru
      _
    %v62 = vld [vmem:[#allocation2] sm:$0xff]
    %v63 = vld [vmem:[#allocation2 + $0x8] sm:$0xff]
    %v64 = vld [vmem:[#allocation5] sm:$0xff]
    %v65 = vld [vmem:[#allocation5 + $0x8] sm:$0xff]
    %v66 = vld [vmem:[#allocation5 + $0x10] sm:$0xff]
    %v67 = vld [vmem:[#allocation5 + $0x18] sm:$0xff]
    %v68 = vld [vmem:[#allocation5 + $0x20] sm:$0xff]
    %v69 = vld [vmem:[#allocation5 + $0x28] sm:$0xff]
    %v70 = vld [vmem:[#allocation5 + $0x30] sm:$0xff]
    %v71 = vld [vmem:[#allocation5 + $0x38] sm:$0xff]
    %v72 = vld [vmem:[#allocation5 + $0x40] sm:$0xff]
    %v73 = vld [vmem:[#allocation5 + $0x48] sm:$0xff]
    %v74 = vld [vmem:[#allocation5 + $0x50] sm:$0xff]
    %v75 = vld [vmem:[#allocation5 + $0x58] sm:$0xff]
    %v76 = vld [vmem:[#allocation5 + $0x60] sm:$0xff]
    %v77 = vld [vmem:[#allocation5 + $0x68] sm:$0xff]
    %v78 = vld [vmem:[#allocation5 + $0x70] sm:$0xff]
    %v79 = vld [vmem:[#allocation5 + $0x78] sm:$0xff]
    %v80 = vld [vmem:[%s2] sm:$0x1]
    %v82 = vlaneseq
    %v83 = vshrl.u32 %v82, 7
    %v84 = vsub.s32 0, %v83
    %v85 = vrot.slane %v80, %v84
    %87 = vmatprep.subr.mxu0 0.0
    %88 = vmatpush1.msra.mxu0 %v64
    %89 = vmatprep.subr.mxu0 0.0
    %90 = vmatpush1.msra.mxu0 %v65
    %91 = vmatprep.subr.mxu0 0.0
    %92 = vmatpush1.msra.mxu0 %v66
    %93 = vmatprep.subr.mxu0 0.0
    %94 = vmatpush1.msra.mxu0 %v67
    %95 = vmatprep.subr.mxu0 0.0
    %96 = vmatpush1.msra.mxu0 %v68
    %97 = vmatprep.subr.mxu0 0.0
    %98 = vmatpush1.msra.mxu0 %v69
    %99 = vmatprep.subr.mxu0 0.0
    %100 = vmatpush1.msra.mxu0 %v70
    %101 = vmatprep.subr.mxu0 0.0
    %102 = vmatpush1.msra.mxu0 %v71
    %103 = vmatprep.subr.mxu0 0.0
    %104 = vmatpush1.msra.mxu0 %v72
    %105 = vmatprep.subr.mxu0 0.0
    %106 = vmatpush1.msra.mxu0 %v73
    %107 = vmatprep.subr.mxu0 0.0
    %108 = vmatpush1.msra.mxu0 %v74
    %109 = vmatprep.subr.mxu0 0.0
    %110 = vmatpush1.msra.mxu0 %v75
    %111 = vmatprep.subr.mxu0 0.0
    %112 = vmatpush1.msra.mxu0 %v76
    %113 = vmatprep.subr.mxu0 0.0
    %114 = vmatpush1.msra.mxu0 %v77
    %115 = vmatprep.subr.mxu0 0.0
    %116 = vmatpush1.msra.mxu0 %v78
    %117 = vmatprep.subr.mxu0 0.0
    %118 = vmatpush1.msra.mxu0 %v79
    %119 = vmatprep.subr.mxu0 0.0
    %120 = vmatpush1.msra.mxu0 0.0
    %121 = vmatprep.subr.mxu0 0.0
    %122 = vmatpush1.msra.mxu0 0.0
    %123 = vmatprep.subr.mxu0 0.0
    %124 = vmatpush1.msra.mxu0 0.0
    %125 = vmatprep.subr.mxu0 0.0
    %126 = vmatpush1.msra.mxu0 0.0
    %127 = vmatprep.subr.mxu0 0.0
    %128 = vmatpush1.msra.mxu0 0.0
    %129 = vmatprep.subr.mxu0 0.0
    %130 = vmatpush1.msra.mxu0 0.0
    %131 = vmatprep.subr.mxu0 0.0
    %132 = vmatpush1.msra.mxu0 0.0
    %133 = vmatprep.subr.mxu0 0.0
    %134 = vmatpush1.msra.mxu0 0.0
    %135 = vmatprep.subr.mxu0 0.0
    %136 = vmatpush1.msra.mxu0 0.0
    %137 = vmatprep.subr.mxu0 0.0
    %138 = vmatpush1.msra.mxu0 0.0
    %139 = vmatprep.subr.mxu0 0.0
    %140 = vmatpush1.msra.mxu0 0.0
    %141 = vmatprep.subr.mxu0 0.0
    %142 = vmatpush1.msra.mxu0 0.0
    %143 = vmatprep.subr.mxu0 0.0
    %144 = vmatpush1.msra.mxu0 0.0
    %145 = vmatprep.subr.mxu0 0.0
    %146 = vmatpush1.msra.mxu0 0.0
    %147 = vmatprep.subr.mxu0 0.0
    %148 = vmatpush1.msra.mxu0 0.0
    %149 = vmatprep.subr.mxu0 0.0
    %150 = vmatpush1.msra.mxu0 0.0
    %151 = vmatprep.mubr.f32.mxu0 0.0
    %152 = vmatmul.mubr.f32.gmra.mrb[0].mxu0 %v62
    %v153 = vpop.f32.mrb[0].mxu0
    %v154 = vadd.f32 %v85, %v153
    %v155 = vpop.f32.mrb[0].mxu0
    %156 = vmatprep.mubr.f32.mxu0 0.0
    %157 = vmatmul.mubr.f32.gmra.mrb[0].mxu0 %v63
    %v158 = vpop.f32.mrb[0].mxu0
    %v159 = vadd.f32 %v85, %v158
    %v160 = vpop.f32.mrb[0].mxu0
    %161 = vdwg.mxu0
    %v162 = vmax.f32 %v154, 0.0
    %v163 = vmax.f32 %v159, 0.0
    %v164 = vld [vmem:[#allocation7] sm:$0xff]
    %v165 = vld [vmem:[#allocation7 + $0x8] sm:$0xff]
    %v166 = vld [vmem:[#allocation7 + $0x10] sm:$0xff]
    %v167 = vld [vmem:[#allocation7 + $0x18] sm:$0xff]
    %v168 = vld [vmem:[#allocation7 + $0x20] sm:$0xff]
    %v169 = vld [vmem:[#allocation7 + $0x28] sm:$0xff]
    %v170 = vld [vmem:[#allocation7 + $0x30] sm:$0xff]
    %v171 = vld [vmem:[#allocation7 + $0x38] sm:$0xff]
    %v172 = vld [vmem:[#allocation7 + $0x40] sm:$0xff]
    %v173 = vld [vmem:[#allocation7 + $0x48] sm:$0xff]
    %v174 = vld [vmem:[#allocation7 + $0x50] sm:$0xff]
    %v175 = vld [vmem:[#allocation7 + $0x58] sm:$0xff]
    %v176 = vld [vmem:[#allocation7 + $0x60] sm:$0xff]
    %v177 = vld [vmem:[#allocation7 + $0x68] sm:$0xff]
    %v178 = vld [vmem:[#allocation7 + $0x70] sm:$0xff]
    %v179 = vld [vmem:[#allocation7 + $0x78] sm:$0xff]
    %v180 = vld [vmem:[%s4] sm:$0x1]
    %v182 = vlaneseq
    %v183 = vshrl.u32 %v182, 7
    %v184 = vsub.s32 0, %v183
    %v185 = vrot.slane %v180, %v184
    %187 = vmatprep.subr.mxu0 0.0
    %188 = vmatpush1.msra.mxu0 %v164
    %189 = vmatprep.subr.mxu0 0.0
    %190 = vmatpush1.msra.mxu0 %v165
    %191 = vmatprep.subr.mxu0 0.0
    %192 = vmatpush1.msra.mxu0 %v166
    %193 = vmatprep.subr.mxu0 0.0
    %194 = vmatpush1.msra.mxu0 %v167
    %195 = vmatprep.subr.mxu0 0.0
    %196 = vmatpush1.msra.mxu0 %v168
    %197 = vmatprep.subr.mxu0 0.0
    %198 = vmatpush1.msra.mxu0 %v169
    %199 = vmatprep.subr.mxu0 0.0
    %200 = vmatpush1.msra.mxu0 %v170
    %201 = vmatprep.subr.mxu0 0.0
    %202 = vmatpush1.msra.mxu0 %v171
    %203 = vmatprep.subr.mxu0 0.0
    %204 = vmatpush1.msra.mxu0 %v172
    %205 = vmatprep.subr.mxu0 0.0
    %206 = vmatpush1.msra.mxu0 %v173
    %207 = vmatprep.subr.mxu0 0.0
    %208 = vmatpush1.msra.mxu0 %v174
    %209 = vmatprep.subr.mxu0 0.0
    %210 = vmatpush1.msra.mxu0 %v175
    %211 = vmatprep.subr.mxu0 0.0
    %212 = vmatpush1.msra.mxu0 %v176
    %213 = vmatprep.subr.mxu0 0.0
    %214 = vmatpush1.msra.mxu0 %v177
    %215 = vmatprep.subr.mxu0 0.0
    %216 = vmatpush1.msra.mxu0 %v178
    %217 = vmatprep.subr.mxu0 0.0
    %218 = vmatpush1.msra.mxu0 %v179
    %219 = vmatprep.subr.mxu0 0.0
    %220 = vmatpush1.msra.mxu0 0.0
    %221 = vmatprep.subr.mxu0 0.0
    %222 = vmatpush1.msra.mxu0 0.0
    %223 = vmatprep.subr.mxu0 0.0
    %224 = vmatpush1.msra.mxu0 0.0
    %225 = vmatprep.subr.mxu0 0.0
    %226 = vmatpush1.msra.mxu0 0.0
    %227 = vmatprep.subr.mxu0 0.0
    %228 = vmatpush1.msra.mxu0 0.0
    %229 = vmatprep.subr.mxu0 0.0
    %230 = vmatpush1.msra.mxu0 0.0
    %231 = vmatprep.subr.mxu0 0.0
    %232 = vmatpush1.msra.mxu0 0.0
    %233 = vmatprep.subr.mxu0 0.0
    %234 = vmatpush1.msra.mxu0 0.0
    %235 = vmatprep.subr.mxu0 0.0
    %236 = vmatpush1.msra.mxu0 0.0
    %237 = vmatprep.subr.mxu0 0.0
    %238 = vmatpush1.msra.mxu0 0.0
    %239 = vmatprep.subr.mxu0 0.0
    %240 = vmatpush1.msra.mxu0 0.0
    %241 = vmatprep.subr.mxu0 0.0
    %242 = vmatpush1.msra.mxu0 0.0
    %243 = vmatprep.subr.mxu0 0.0
    %244 = vmatpush1.msra.mxu0 0.0
    %245 = vmatprep.subr.mxu0 0.0
    %246 = vmatpush1.msra.mxu0 0.0
    %247 = vmatprep.subr.mxu0 0.0
    %248 = vmatpush1.msra.mxu0 0.0
    %249 = vmatprep.subr.mxu0 0.0
    %250 = vmatpush1.msra.mxu0 0.0
    %251 = vmatprep.mubr.f32.mxu0 0.0
    %252 = vmatmul.mubr.f32.gmra.mrb[0].mxu0 %v162
    %v253 = vpop.f32.mrb[0].mxu0
    %v254 = vadd.f32 %v185, %v253
    %v255 = vpop.f32.mrb[0].mxu0
    %256 = vmatprep.mubr.f32.mxu0 0.0
    %257 = vmatmul.mubr.f32.gmra.mrb[0].mxu0 %v163
    %v258 = vpop.f32.mrb[0].mxu0
    %v259 = vadd.f32 %v185, %v258
    %v260 = vpop.f32.mrb[0].mxu0
    %261 = vdwg.mxu0
    %s262 = scalar_lea.vmem [#allocation5], 128
    %v263 = vld [vmem:[%s262] sm:$0xff]
    %v264 = vld [vmem:[%s262 + $0x8] sm:$0xff]
    %v265 = vld [vmem:[%s262 + $0x10] sm:$0xff]
    %v266 = vld [vmem:[%s262 + $0x18] sm:$0xff]
    %v267 = vld [vmem:[%s262 + $0x20] sm:$0xff]
    %v268 = vld [vmem:[%s262 + $0x28] sm:$0xff]
    %v269 = vld [vmem:[%s262 + $0x30] sm:$0xff]
    %v270 = vld [vmem:[%s262 + $0x38] sm:$0xff]
    %v271 = vld [vmem:[%s262 + $0x40] sm:$0xff]
    %v272 = vld [vmem:[%s262 + $0x48] sm:$0xff]
    %v273 = vld [vmem:[%s262 + $0x50] sm:$0xff]
    %v274 = vld [vmem:[%s262 + $0x58] sm:$0xff]
    %v275 = vld [vmem:[%s262 + $0x60] sm:$0xff]
    %v276 = vld [vmem:[%s262 + $0x68] sm:$0xff]
    %v277 = vld [vmem:[%s262 + $0x70] sm:$0xff]
    %v278 = vld [vmem:[%s262 + $0x78] sm:$0xff]
    %s279 = scalar_lea.vmem %s2, 1
    %v280 = vld [vmem:[%s279] sm:$0x1]
    %v282 = vlaneseq
    %v283 = vshrl.u32 %v282, 7
    %v284 = vsub.s32 0, %v283
    %v285 = vrot.slane %v280, %v284
    %287 = vmatprep.subr.mxu0 0.0
    %288 = vmatpush1.msra.mxu0 %v263
    %289 = vmatprep.subr.mxu0 0.0
    %290 = vmatpush1.msra.mxu0 %v264
    %291 = vmatprep.subr.mxu0 0.0
    %292 = vmatpush1.msra.mxu0 %v265
    %293 = vmatprep.subr.mxu0 0.0
    %294 = vmatpush1.msra.mxu0 %v266
    %295 = vmatprep.subr.mxu0 0.0
    %296 = vmatpush1.msra.mxu0 %v267
    %297 = vmatprep.subr.mxu0 0.0
    %298 = vmatpush1.msra.mxu0 %v268
    %299 = vmatprep.subr.mxu0 0.0
    %300 = vmatpush1.msra.mxu0 %v269
    %301 = vmatprep.subr.mxu0 0.0
    %302 = vmatpush1.msra.mxu0 %v270
    %303 = vmatprep.subr.mxu0 0.0
    %304 = vmatpush1.msra.mxu0 %v271
    %305 = vmatprep.subr.mxu0 0.0
    %306 = vmatpush1.msra.mxu0 %v272
    %307 = vmatprep.subr.mxu0 0.0
    %308 = vmatpush1.msra.mxu0 %v273
    %309 = vmatprep.subr.mxu0 0.0
    %310 = vmatpush1.msra.mxu0 %v274
    %311 = vmatprep.subr.mxu0 0.0
    %312 = vmatpush1.msra.mxu0 %v275
    %313 = vmatprep.subr.mxu0 0.0
    %314 = vmatpush1.msra.mxu0 %v276
    %315 = vmatprep.subr.mxu0 0.0
    %316 = vmatpush1.msra.mxu0 %v277
    %317 = vmatprep.subr.mxu0 0.0
    %318 = vmatpush1.msra.mxu0 %v278
    %319 = vmatprep.subr.mxu0 0.0
    %320 = vmatpush1.msra.mxu0 0.0
    %321 = vmatprep.subr.mxu0 0.0
    %322 = vmatpush1.msra.mxu0 0.0
    %323 = vmatprep.subr.mxu0 0.0
    %324 = vmatpush1.msra.mxu0 0.0
    %325 = vmatprep.subr.mxu0 0.0
    %326 = vmatpush1.msra.mxu0 0.0
    %327 = vmatprep.subr.mxu0 0.0
    %328 = vmatpush1.msra.mxu0 0.0
    %329 = vmatprep.subr.mxu0 0.0
    %330 = vmatpush1.msra.mxu0 0.0
    %331 = vmatprep.subr.mxu0 0.0
    %332 = vmatpush1.msra.mxu0 0.0
    %333 = vmatprep.subr.mxu0 0.0
    %334 = vmatpush1.msra.mxu0 0.0
    %335 = vmatprep.subr.mxu0 0.0
    %336 = vmatpush1.msra.mxu0 0.0
    %337 = vmatprep.subr.mxu0 0.0
    %338 = vmatpush1.msra.mxu0 0.0
    %339 = vmatprep.subr.mxu0 0.0
    %340 = vmatpush1.msra.mxu0 0.0
    %341 = vmatprep.subr.mxu0 0.0
    %342 = vmatpush1.msra.mxu0 0.0
    %343 = vmatprep.subr.mxu0 0.0
    %344 = vmatpush1.msra.mxu0 0.0
    %345 = vmatprep.subr.mxu0 0.0
    %346 = vmatpush1.msra.mxu0 0.0
    %347 = vmatprep.subr.mxu0 0.0
    %348 = vmatpush1.msra.mxu0 0.0
    %349 = vmatprep.subr.mxu0 0.0
    %350 = vmatpush1.msra.mxu0 0.0
    %351 = vmatprep.mubr.f32.mxu0 0.0
    %352 = vmatmul.mubr.f32.gmra.mrb[0].mxu0 %v254
    %v353 = vpop.f32.mrb[0].mxu0
    %v354 = vadd.f32 %v285, %v353
    %v355 = vpop.f32.mrb[0].mxu0
    %356 = vmatprep.mubr.f32.mxu0 0.0
    %357 = vmatmul.mubr.f32.gmra.mrb[0].mxu0 %v259
    %v358 = vpop.f32.mrb[0].mxu0
    %v359 = vadd.f32 %v285, %v358
    %v360 = vpop.f32.mrb[0].mxu0
    %361 = vdwg.mxu0
    %v362 = vmax.f32 %v354, 0.0
    %v363 = vmax.f32 %v359, 0.0
    %s364 = scalar_lea.vmem [#allocation7], 128
    %v365 = vld [vmem:[%s364] sm:$0xff]
    %v366 = vld [vmem:[%s364 + $0x8] sm:$0xff]
    %v367 = vld [vmem:[%s364 + $0x10] sm:$0xff]
    %v368 = vld [vmem:[%s364 + $0x18] sm:$0xff]
    %v369 = vld [vmem:[%s364 + $0x20] sm:$0xff]
    %v370 = vld [vmem:[%s364 + $0x28] sm:$0xff]
    %v371 = vld [vmem:[%s364 + $0x30] sm:$0xff]
    %v372 = vld [vmem:[%s364 + $0x38] sm:$0xff]
    %v373 = vld [vmem:[%s364 + $0x40] sm:$0xff]
    %v374 = vld [vmem:[%s364 + $0x48] sm:$0xff]
    %v375 = vld [vmem:[%s364 + $0x50] sm:$0xff]
    %v376 = vld [vmem:[%s364 + $0x58] sm:$0xff]
    %v377 = vld [vmem:[%s364 + $0x60] sm:$0xff]
    %v378 = vld [vmem:[%s364 + $0x68] sm:$0xff]
    %v379 = vld [vmem:[%s364 + $0x70] sm:$0xff]
    %v380 = vld [vmem:[%s364 + $0x78] sm:$0xff]
    %s381 = scalar_lea.vmem %s4, 1
    %v382 = vld [vmem:[%s381] sm:$0x1]
    %v384 = vlaneseq
    %v385 = vshrl.u32 %v384, 7
    %v386 = vsub.s32 0, %v385
    %v387 = vrot.slane %v382, %v386
    %389 = vmatprep.subr.mxu0 0.0
    %390 = vmatpush1.msra.mxu0 %v365
    %391 = vmatprep.subr.mxu0 0.0
    %392 = vmatpush1.msra.mxu0 %v366
    %393 = vmatprep.subr.mxu0 0.0
    %394 = vmatpush1.msra.mxu0 %v367
    %395 = vmatprep.subr.mxu0 0.0
    %396 = vmatpush1.msra.mxu0 %v368
    %397 = vmatprep.subr.mxu0 0.0
    %398 = vmatpush1.msra.mxu0 %v369
    %399 = vmatprep.subr.mxu0 0.0
    %400 = vmatpush1.msra.mxu0 %v370
    %401 = vmatprep.subr.mxu0 0.0
    %402 = vmatpush1.msra.mxu0 %v371
    %403 = vmatprep.subr.mxu0 0.0
    %404 = vmatpush1.msra.mxu0 %v372
    %405 = vmatprep.subr.mxu0 0.0
    %406 = vmatpush1.msra.mxu0 %v373
    %407 = vmatprep.subr.mxu0 0.0
    %408 = vmatpush1.msra.mxu0 %v374
    %409 = vmatprep.subr.mxu0 0.0
    %410 = vmatpush1.msra.mxu0 %v375
    %411 = vmatprep.subr.mxu0 0.0
    %412 = vmatpush1.msra.mxu0 %v376
    %413 = vmatprep.subr.mxu0 0.0
    %414 = vmatpush1.msra.mxu0 %v377
    %415 = vmatprep.subr.mxu0 0.0
    %416 = vmatpush1.msra.mxu0 %v378
    %417 = vmatprep.subr.mxu0 0.0
    %418 = vmatpush1.msra.mxu0 %v379
    %419 = vmatprep.subr.mxu0 0.0
    %420 = vmatpush1.msra.mxu0 %v380
    %421 = vmatprep.subr.mxu0 0.0
    %422 = vmatpush1.msra.mxu0 0.0
    %423 = vmatprep.subr.mxu0 0.0
    %424 = vmatpush1.msra.mxu0 0.0
    %425 = vmatprep.subr.mxu0 0.0
    %426 = vmatpush1.msra.mxu0 0.0
    %427 = vmatprep.subr.mxu0 0.0
    %428 = vmatpush1.msra.mxu0 0.0
    %429 = vmatprep.subr.mxu0 0.0
    %430 = vmatpush1.msra.mxu0 0.0
    %431 = vmatprep.subr.mxu0 0.0
    %432 = vmatpush1.msra.mxu0 0.0
    %433 = vmatprep.subr.mxu0 0.0
    %434 = vmatpush1.msra.mxu0 0.0
    %435 = vmatprep.subr.mxu0 0.0
    %436 = vmatpush1.msra.mxu0 0.0
    %437 = vmatprep.subr.mxu0 0.0
    %438 = vmatpush1.msra.mxu0 0.0
    %439 = vmatprep.subr.mxu0 0.0
    %440 = vmatpush1.msra.mxu0 0.0
    %441 = vmatprep.subr.mxu0 0.0
    %442 = vmatpush1.msra.mxu0 0.0
    %443 = vmatprep.subr.mxu0 0.0
    %444 = vmatpush1.msra.mxu0 0.0
    %445 = vmatprep.subr.mxu0 0.0
    %446 = vmatpush1.msra.mxu0 0.0
    %447 = vmatprep.subr.mxu0 0.0
    %448 = vmatpush1.msra.mxu0 0.0
    %449 = vmatprep.subr.mxu0 0.0
    %450 = vmatpush1.msra.mxu0 0.0
    %451 = vmatprep.subr.mxu0 0.0
    %452 = vmatpush1.msra.mxu0 0.0
    %453 = vmatprep.mubr.f32.mxu0 0.0
    %454 = vmatmul.mubr.f32.gmra.mrb[0].mxu0 %v362
    %v455 = vpop.f32.mrb[0].mxu0
    %v456 = vadd.f32 %v387, %v455
    %v457 = vpop.f32.mrb[0].mxu0
    %458 = vmatprep.mubr.f32.mxu0 0.0
    %459 = vmatmul.mubr.f32.gmra.mrb[0].mxu0 %v363
    %v460 = vpop.f32.mrb[0].mxu0
    %v461 = vadd.f32 %v387, %v460
    %v462 = vpop.f32.mrb[0].mxu0
    %463 = vdwg.mxu0
    %464 = vst [vmem:[#allocation8] sm:$0xff] %v456
    %465 = vst [vmem:[#allocation8 + $0x8] sm:$0xff] %v461
    // Predicated region
    $region34: #{tpu_custom_call.1} parent=1 // pred_check
      _
    $region35: #{tpu_custom_call.1} parent=1 // pred_check_branch
      %467 = sbr.rel (0) target = $region37
    $region36: #{tpu_custom_call.1} parent=1 // pred_region
      %s469 = ssub.s32 256, 256
      %470 = vsyncadd [#allocation4], %s469
      %s471 = sshll.u32 [#allocation8], 4
      %s472 = int_to_ptr.vmem [resolvable:$true] %s471
      %477 = dma.vmem_to_hbm [thread:$0]  %s472, 256, %s5, [#allocation4], 128, 128, 8
    $region37: #{tpu_custom_call.1} parent=1 // pred_fallthru
      _
    // Predicated region
    $region38: #{tpu_custom_call.1} parent=1 // pred_check
      _
    $region39: #{tpu_custom_call.1} parent=1 // pred_check_branch
      %479 = sbr.rel (0) target = $region41
    $region40: #{tpu_custom_call.1} parent=1 // pred_region
      %480 = dma.done [#allocation4], 256
    $region41: #{tpu_custom_call.1} parent=1 // pred_fallthru
      _
    %481 = vsyncpa [#allocation3], 1
    %482 = vsyncpa [#allocation6], 1
    %483 = vsyncpa [#allocation4], 1

</llo_original>
